<compile_context>
chip_gen: v5e
topology: v5e:2x2
jax: 0.10.0
libtpu: 0.0.40
codegen_flags: <defaults>
</compile_context>

<pallas_src>
import jax
import jax.numpy as jnp
from jax import lax
from jax.experimental import pallas as pl
from jax.experimental.pallas import tpu as pltpu


def _round_up(x, m):
    return ((x + m - 1) // m) * m


def _pad_gate_weight(w, H, H_pad):
    # w: (H, 4H), gate order [i,f,g,o] -> (H_pad, 4*H_pad), zero-padded per gate.
    out = jnp.zeros((H_pad, 4 * H_pad), w.dtype)
    for k in range(4):
        out = out.at[:H, k * H_pad:k * H_pad + H].set(w[:, k * H:(k + 1) * H])
    return out


def _pad_gate_bias(b, H, H_pad):
    out = jnp.zeros((4 * H_pad,), b.dtype)
    for k in range(4):
        out = out.at[k * H_pad:k * H_pad + H].set(b[k * H:(k + 1) * H])
    return out


def _make_lstm_kernel(seq_len, needs_mask, unroll):
    """seq_len / needs_mask / unroll are static (trace-time) parameters."""

    def kernel(gates_ref, w_hh_ref, w_fc_ref, b_fc_ref, out_ref, h_sc, c_sc):
        # gates_ref: (T_CHUNK, B_blk, 4*H_pad) f32 -- pre-projected x@W_ih + b
        # w_hh_ref:  (H_pad, 4*H_pad) compute dtype (per-gate padded)
        # w_fc_ref:  (H_pad, O_pad) compute dtype;  b_fc_ref: (1, O_pad) f32
        # out_ref:   (B_blk, O_pad) f32
        # h_sc/c_sc: VMEM (B_blk, H_pad) f32 -- state carried across time chunks
        ti = pl.program_id(1)
        T = gates_ref.shape[0]
        Hp = w_hh_ref.shape[0]

        @pl.when(ti == 0)
        def _init():
            h_sc[...] = jnp.zeros_like(h_sc)
            c_sc[...] = jnp.zeros_like(c_sc)

        w_hh = w_hh_ref[...]
        chunk_base = ti * T

        def step(s, carry):
            h, c = carry
            # Only the dependent h @ W_hh matmul is on the per-step path;
            # the x projection was done whole-sequence in the wrapper.
            g = gates_ref[s] + jnp.dot(
                h.astype(w_hh.dtype), w_hh, preferred_element_type=jnp.float32)
            i_g = jax.nn.sigmoid(g[:, 0 * Hp:1 * Hp])
            f_g = jax.nn.sigmoid(g[:, 1 * Hp:2 * Hp])
            g_g = jnp.tanh(g[:, 2 * Hp:3 * Hp])
            o_g = jax.nn.sigmoid(g[:, 3 * Hp:4 * Hp])
            c_new = f_g * c + i_g * g_g
            h_new = o_g * jnp.tanh(c_new)
            if needs_mask:
                # Pad time steps (beyond the real sequence) must not update
                # state: an LSTM step is not identity on zero input.
                valid = (chunk_base + s) < seq_len
                h_new = jnp.where(valid, h_new, h)
                c_new = jnp.where(valid, c_new, c)
            return h_new, c_new

        h, c = lax.fori_loop(0, T, step, (h_sc[...], c_sc[...]), unroll=unroll)
        h_sc[...] = h
        c_sc[...] = c

        @pl.when(ti == pl.num_programs(1) - 1)
        def _final():
            # FC epilogue on the last hidden state; lane-dense (B_blk, O_pad) store.
            out_ref[...] = (
                jnp.dot(h.astype(w_fc_ref.dtype), w_fc_ref[...],
                        preferred_element_type=jnp.float32)
                + b_fc_ref[...]).astype(out_ref.dtype)

    return kernel


def char_rnn_forward(x_tokens, params, *, compute_dtype=jnp.bfloat16,
                     t_chunk=None, b_block=8):
    B, S = x_tokens.shape
    V, H = params["embedding"].shape
    O = params["w_fc_t"].shape[1]

    B_pad = _round_up(B, b_block)
    H_pad = _round_up(H, 128)
    O_pad = _round_up(O, 128)
    nb = B_pad // b_block

    if t_chunk is None:
        # Large chunks amortize per-grid-step overhead; S is padded + masked,
        # so no need to hunt for divisors.
        t_chunk = min(64, S)
    S_pad = _round_up(S, t_chunk)
    num_chunks = S_pad // t_chunk
    needs_mask = S_pad != S
    unroll = min(t_chunk, 8)

    # ---- wrapper glue (plain XLA, off the kernel's serial path) -------------
    # Embedding gather directly in compute dtype (no full-size f32 intermediate).
    emb_tbl = jnp.zeros((V, H_pad), compute_dtype).at[:, :H].set(
        params["embedding"].astype(compute_dtype))
    emb = jnp.take(emb_tbl, x_tokens, axis=0)                 # (B, S, H_pad)

    # Whole-sequence input projection + bias at full MXU utilization (XLA).
    w_ih = _pad_gate_weight(params["w_ih_t"], H, H_pad).astype(compute_dtype)
    b = _pad_gate_bias(params["b_ih"] + params["b_hh"], H, H_pad
                       ).astype(jnp.float32)
    gates_x = jnp.einsum("bsh,hg->bsg", emb, w_ih,
                         preferred_element_type=jnp.float32) + b  # (B,S,4Hp) f32
    gates_tm = jnp.transpose(gates_x, (1, 0, 2))                  # (S,B,4Hp)
    gates_pad = jnp.zeros((S_pad, B_pad, 4 * H_pad), jnp.float32
                          ).at[:S, :B, :].set(gates_tm)

    # Resident weights: only W_hh (+ FC) stay in VMEM across the whole grid.
    w_hh = _pad_gate_weight(params["w_hh_t"], H, H_pad).astype(compute_dtype)
    w_fc = jnp.zeros((H_pad, O_pad), compute_dtype).at[:H, :O].set(
        params["w_fc_t"].astype(compute_dtype))
    b_fc = jnp.zeros((1, O_pad), jnp.float32).at[0, :O].set(params["b_fc"])

    kernel = _make_lstm_kernel(S, needs_mask, unroll)

    out_pad = pl.pallas_call(
        kernel,
        out_shape=jax.ShapeDtypeStruct((B_pad, O_pad), jnp.float32),
        grid_spec=pltpu.PrefetchScalarGridSpec(
            num_scalar_prefetch=0,
            # (batch blocks, time chunks): batch is independent -> "parallel"
            # (uses both v7x TensorCores when B_pad >= 16); time is the serial
            # recurrence -> "arbitrary".
            grid=(nb, num_chunks),
            in_specs=[
                # streamed pre-projected gate chunk (auto double-buffered DMA)
                pl.BlockSpec((t_chunk, b_block, 4 * H_pad),
                             lambda bi, ti: (ti, bi, 0)),
                # weights/biases: same block every step -> VMEM-resident
                pl.BlockSpec((H_pad, 4 * H_pad), lambda bi, ti: (0, 0)),
                pl.BlockSpec((H_pad, O_pad), lambda bi, ti: (0, 0)),
                pl.BlockSpec((1, O_pad), lambda bi, ti: (0, 0)),
            ],
            out_specs=pl.BlockSpec((b_block, O_pad), lambda bi, ti: (bi, 0)),
            scratch_shapes=[
                pltpu.VMEM((b_block, H_pad), jnp.float32),   # h state
                pltpu.VMEM((b_block, H_pad), jnp.float32),   # c state
            ],
        ),
        compiler_params=pltpu.CompilerParams(
            dimension_semantics=("parallel", "arbitrary")),
    )(gates_pad, w_hh, w_fc, b_fc)

    return out_pad[:B, :O]


def init_params(key, input_size, hidden_size, output_size):
    ks = jax.random.split(key, 6)
    scale = 0.1
    return {
        "embedding": scale * jax.random.normal(
            ks[0], (input_size, hidden_size), jnp.float32),
        # PyTorch stores (4H, H); keep the transposed (H, 4H) layout for x @ W.
        "w_ih_t": scale * jax.random.normal(
            ks[1], (hidden_size, 4 * hidden_size), jnp.float32),
        "w_hh_t": scale * jax.random.normal(
            ks[2], (hidden_size, 4 * hidden_size), jnp.float32),
        "b_ih": scale * jax.random.normal(ks[3], (4 * hidden_size,), jnp.float32),
        "b_hh": scale * jax.random.normal(ks[4], (4 * hidden_size,), jnp.float32),
        # PyTorch fc weight is (O, H); keep transposed (H, O).
        "w_fc_t": scale * jax.random.normal(
            ks[5], (hidden_size, output_size), jnp.float32),
        "b_fc": jnp.zeros((output_size,), jnp.float32),
    }


def char_rnn_reference(x_tokens, params):
    """Pure-JAX reference mirroring the PyTorch module semantics."""
    emb = jnp.take(params["embedding"], x_tokens, axis=0)  # (B, S, H)
    B, S, H = emb.shape
    b = (params["b_ih"] + params["b_hh"]).reshape(1, -1)

    def step(carry, xt):
        h, c = carry
        gates = xt @ params["w_ih_t"] + h @ params["w_hh_t"] + b
        i_g = jax.nn.sigmoid(gates[:, 0 * H:1 * H])
        f_g = jax.nn.sigmoid(gates[:, 1 * H:2 * H])
        g_g = jnp.tanh(gates[:, 2 * H:3 * H])
        o_g = jax.nn.sigmoid(gates[:, 3 * H:4 * H])
        c_new = f_g * c + i_g * g_g
        h_new = o_g * jnp.tanh(c_new)
        return (h_new, c_new), None

    h0 = jnp.zeros((B, H), jnp.float32)
    c0 = jnp.zeros((B, H), jnp.float32)
    (h_last, _), _ = lax.scan(step, (h0, c0), jnp.transpose(emb, (1, 0, 2)))
    return h_last @ params["w_fc_t"] + params["b_fc"].reshape(1, -1)


if __name__ == "__main__":
    input_size = 16    # vocab size
    hidden_size = 32
    output_size = 16

    key = jax.random.PRNGKey(0)
    k_param, k_x1, k_x2 = jax.random.split(key, 3)
    params = init_params(k_param, input_size, hidden_size, output_size)

    # --- test 1: small batch/seq, multi-chunk carry, f32 exact-ish check ----
    x1 = jax.random.randint(k_x1, (2, 8), 0, input_size, dtype=jnp.int32)
    ref1 = char_rnn_reference(x1, params)
    out1 = jax.block_until_ready(
        char_rnn_forward(x1, params, compute_dtype=jnp.float32, t_chunk=4))
    assert out1.shape == (2, output_size)
    assert jnp.allclose(out1, ref1, atol=5e-4, rtol=1e-4), \
        "f32 kernel mismatch vs reference (t_chunk=4)"

    # --- test 2: S not divisible by t_chunk -> padded + masked time steps ---
    out1b = jax.block_until_ready(
        char_rnn_forward(x1, params, compute_dtype=jnp.float32, t_chunk=3))
    assert jnp.allclose(out1b, ref1, atol=5e-4, rtol=1e-4), \
        "f32 kernel mismatch vs reference (masked pad steps, t_chunk=3)"

    # --- test 3: batch > 8 -> multiple batch blocks on the parallel axis ----
    x2 = jax.random.randint(k_x2, (10, 13), 0, input_size, dtype=jnp.int32)
    ref2 = char_rnn_reference(x2, params)
    out2 = jax.block_until_ready(
        char_rnn_forward(x2, params, compute_dtype=jnp.float32, t_chunk=5))
    assert out2.shape == (10, output_size)
    assert jnp.allclose(out2, ref2, atol=5e-4, rtol=1e-4), \
        "f32 kernel mismatch vs reference (batch-parallel grid axis)"

    # --- test 4: default perf config (bf16 operands, f32 accum/state) -------
    out = jax.block_until_ready(char_rnn_forward(x1, params))
    assert out.shape == (2, output_size)
    assert jnp.allclose(out, ref1, atol=2e-2, rtol=0), \
        "bf16 kernel mismatch vs reference"

    print("KERNEL_OK")
</pallas_src>

<mosaic_0001>
module attributes {stable_mosaic.version = 11 : i64} {
  func.func @kernel(%arg0: i32, %arg1: i32, %arg2: memref<4x8x512xf32, #tpu.memory_space<vmem>>, %arg3: memref<128x512xf32, #tpu.memory_space<vmem>>, %arg4: memref<128x128xf32, #tpu.memory_space<vmem>>, %arg5: memref<1x128xf32, #tpu.memory_space<vmem>>, %arg6: memref<8x128xf32, #tpu.memory_space<vmem>>, %arg7: memref<8x128xf32, #tpu.memory_space<vmem>>, %arg8: memref<8x128xf32, #tpu.memory_space<vmem>>) attributes {dimension_semantics = [#tpu.dimension_semantics<parallel>, #tpu.dimension_semantics<arbitrary>], iteration_bounds = array<i64: 1, 2>, scalar_prefetch = 0 : i64, scratch_operands = 2 : i64, tpu.core_type = #tpu.core_type<tc>, window_params = [{transform_indices = @transform_0, window_bounds = array<i64: 4, 8, 512>}, {pipeline_mode = #tpu.pipeline_mode<synchronous>, transform_indices = @transform_1, window_bounds = array<i64: 128, 512>}, {pipeline_mode = #tpu.pipeline_mode<synchronous>, transform_indices = @transform_2, window_bounds = array<i64: 128, 128>}, {pipeline_mode = #tpu.pipeline_mode<synchronous>, transform_indices = @transform_3, window_bounds = array<i64: 1, 128>}, {transform_indices = @transform_4, window_bounds = array<i64: 8, 128>}]} {
    %c0_i32 = arith.constant 0 : i32
    %0 = arith.cmpi eq, %arg1, %c0_i32 : i32
    %1 = arith.extui %0 : i1 to i32
    %c0_i32_0 = arith.constant 0 : i32
    %2 = arith.cmpi ne, %1, %c0_i32_0 : i32
    scf.if %2 {
      %cst_36 = arith.constant 0.000000e+00 : f32
      %131 = vector.broadcast %cst_36 : f32 to vector<8x128xf32>
      %c0_37 = arith.constant 0 : index
      %c0_38 = arith.constant 0 : index
      %132 = vector.load %arg7[%c0_37, %c0_38] : memref<8x128xf32, #tpu.memory_space<vmem>>, vector<8x128xf32>
      tpu.vector_store %arg7[%c0_37, %c0_38], %131 {strides = array<i32>} : memref<8x128xf32, #tpu.memory_space<vmem>>, vector<8x128xf32>,
      %cst_39 = arith.constant 0.000000e+00 : f32
      %133 = vector.broadcast %cst_39 : f32 to vector<8x128xf32>
      %c0_40 = arith.constant 0 : index
      %c0_41 = arith.constant 0 : index
      %134 = vector.load %arg8[%c0_40, %c0_41] : memref<8x128xf32, #tpu.memory_space<vmem>>, vector<8x128xf32>
      tpu.vector_store %arg8[%c0_40, %c0_41], %133 {strides = array<i32>} : memref<8x128xf32, #tpu.memory_space<vmem>>, vector<8x128xf32>,
    } else {
    }
    %c0 = arith.constant 0 : index
    %c0_1 = arith.constant 0 : index
    %3 = vector.load %arg3[%c0, %c0_1] : memref<128x512xf32, #tpu.memory_space<vmem>>, vector<128x512xf32>
    %c0_2 = arith.constant 0 : index
    %c0_3 = arith.constant 0 : index
    %4 = vector.load %arg7[%c0_2, %c0_3] : memref<8x128xf32, #tpu.memory_space<vmem>>, vector<8x128xf32>
    %c0_4 = arith.constant 0 : index
    %c0_5 = arith.constant 0 : index
    %5 = vector.load %arg8[%c0_4, %c0_5] : memref<8x128xf32, #tpu.memory_space<vmem>>, vector<8x128xf32>
    %c0_i32_6 = arith.constant 0 : i32
    %6 = arith.index_cast %c0_i32_6 : i32 to index
    %c0_7 = arith.constant 0 : index
    %c0_8 = arith.constant 0 : index
    %7 = vector.load %arg2[%6, %c0_7, %c0_8] : memref<4x8x512xf32, #tpu.memory_space<vmem>>, vector<1x8x512xf32>
    %8 = vector.shape_cast %7 : vector<1x8x512xf32> to vector<8x512xf32>
    %cst = arith.constant dense<0.000000e+00> : vector<8x512xf32>
    %9 = tpu.matmul %4, %3, %cst {dimension_numbers = #tpu.dot_dimension_numbers<[1], [0], [0], [1], [0, 0, 1, 1], [], []>} : vector<8x128xf32>, vector<128x512xf32>, vector<8x512xf32> -> vector<8x512xf32>
    %10 = arith.addf %8, %9 : vector<8x512xf32>
    %11 = vector.extract_strided_slice %10 {offsets = [0, 0], sizes = [8, 128], strides = [1, 1]} : vector<8x512xf32> to vector<8x128xf32>
    %12 = arith.negf %11 : vector<8x128xf32>
    %13 = math.exp %12 : vector<8x128xf32>
    %cst_9 = arith.constant 1.000000e+00 : f32
    %14 = vector.broadcast %cst_9 : f32 to vector<8x128xf32>
    %15 = arith.addf %14, %13 : vector<8x128xf32>
    %16 = arith.divf %14, %15 : vector<8x128xf32>
    %17 = vector.extract_strided_slice %10 {offsets = [0, 128], sizes = [8, 128], strides = [1, 1]} : vector<8x512xf32> to vector<8x128xf32>
    %18 = arith.negf %17 : vector<8x128xf32>
    %19 = math.exp %18 : vector<8x128xf32>
    %cst_10 = arith.constant 1.000000e+00 : f32
    %20 = vector.broadcast %cst_10 : f32 to vector<8x128xf32>
    %21 = arith.addf %20, %19 : vector<8x128xf32>
    %22 = arith.divf %20, %21 : vector<8x128xf32>
    %23 = vector.extract_strided_slice %10 {offsets = [0, 256], sizes = [8, 128], strides = [1, 1]} : vector<8x512xf32> to vector<8x128xf32>
    %24 = math.tanh %23 : vector<8x128xf32>
    %25 = vector.extract_strided_slice %10 {offsets = [0, 384], sizes = [8, 128], strides = [1, 1]} : vector<8x512xf32> to vector<8x128xf32>
    %26 = arith.negf %25 : vector<8x128xf32>
    %27 = math.exp %26 : vector<8x128xf32>
    %cst_11 = arith.constant 1.000000e+00 : f32
    %28 = vector.broadcast %cst_11 : f32 to vector<8x128xf32>
    %29 = arith.addf %28, %27 : vector<8x128xf32>
    %30 = arith.divf %28, %29 : vector<8x128xf32>
    %31 = arith.mulf %22, %5 : vector<8x128xf32>
    %32 = arith.mulf %16, %24 : vector<8x128xf32>
    %33 = arith.addf %31, %32 : vector<8x128xf32>
    %34 = math.tanh %33 : vector<8x128xf32>
    %35 = arith.mulf %30, %34 : vector<8x128xf32>
    %c1_i32 = arith.constant 1 : i32
    %36 = arith.index_cast %c1_i32 : i32 to index
    %c0_12 = arith.constant 0 : index
    %c0_13 = arith.constant 0 : index
    %37 = vector.load %arg2[%36, %c0_12, %c0_13] : memref<4x8x512xf32, #tpu.memory_space<vmem>>, vector<1x8x512xf32>
    %38 = vector.shape_cast %37 : vector<1x8x512xf32> to vector<8x512xf32>
    %cst_14 = arith.constant dense<0.000000e+00> : vector<8x512xf32>
    %39 = tpu.matmul %35, %3, %cst_14 {dimension_numbers = #tpu.dot_dimension_numbers<[1], [0], [0], [1], [0, 0, 1, 1], [], []>} : vector<8x128xf32>, vector<128x512xf32>, vector<8x512xf32> -> vector<8x512xf32>
    %40 = arith.addf %38, %39 : vector<8x512xf32>
    %41 = vector.extract_strided_slice %40 {offsets = [0, 0], sizes = [8, 128], strides = [1, 1]} : vector<8x512xf32> to vector<8x128xf32>
    %42 = arith.negf %41 : vector<8x128xf32>
    %43 = math.exp %42 : vector<8x128xf32>
    %cst_15 = arith.constant 1.000000e+00 : f32
    %44 = vector.broadcast %cst_15 : f32 to vector<8x128xf32>
    %45 = arith.addf %44, %43 : vector<8x128xf32>
    %46 = arith.divf %44, %45 : vector<8x128xf32>
    %47 = vector.extract_strided_slice %40 {offsets = [0, 128], sizes = [8, 128], strides = [1, 1]} : vector<8x512xf32> to vector<8x128xf32>
    %48 = arith.negf %47 : vector<8x128xf32>
    %49 = math.exp %48 : vector<8x128xf32>
    %cst_16 = arith.constant 1.000000e+00 : f32
    %50 = vector.broadcast %cst_16 : f32 to vector<8x128xf32>
    %51 = arith.addf %50, %49 : vector<8x128xf32>
    %52 = arith.divf %50, %51 : vector<8x128xf32>
    %53 = vector.extract_strided_slice %40 {offsets = [0, 256], sizes = [8, 128], strides = [1, 1]} : vector<8x512xf32> to vector<8x128xf32>
    %54 = math.tanh %53 : vector<8x128xf32>
    %55 = vector.extract_strided_slice %40 {offsets = [0, 384], sizes = [8, 128], strides = [1, 1]} : vector<8x512xf32> to vector<8x128xf32>
    %56 = arith.negf %55 : vector<8x128xf32>
    %57 = math.exp %56 : vector<8x128xf32>
    %cst_17 = arith.constant 1.000000e+00 : f32
    %58 = vector.broadcast %cst_17 : f32 to vector<8x128xf32>
    %59 = arith.addf %58, %57 : vector<8x128xf32>
    %60 = arith.divf %58, %59 : vector<8x128xf32>
    %61 = arith.mulf %52, %33 : vector<8x128xf32>
    %62 = arith.mulf %46, %54 : vector<8x128xf32>
    %63 = arith.addf %61, %62 : vector<8x128xf32>
    %64 = math.tanh %63 : vector<8x128xf32>
    %65 = arith.mulf %60, %64 : vector<8x128xf32>
    %c2_i32 = arith.constant 2 : i32
    %66 = arith.index_cast %c2_i32 : i32 to index
    %c0_18 = arith.constant 0 : index
    %c0_19 = arith.constant 0 : index
    %67 = vector.load %arg2[%66, %c0_18, %c0_19] : memref<4x8x512xf32, #tpu.memory_space<vmem>>, vector<1x8x512xf32>
    %68 = vector.shape_cast %67 : vector<1x8x512xf32> to vector<8x512xf32>
    %cst_20 = arith.constant dense<0.000000e+00> : vector<8x512xf32>
    %69 = tpu.matmul %65, %3, %cst_20 {dimension_numbers = #tpu.dot_dimension_numbers<[1], [0], [0], [1], [0, 0, 1, 1], [], []>} : vector<8x128xf32>, vector<128x512xf32>, vector<8x512xf32> -> vector<8x512xf32>
    %70 = arith.addf %68, %69 : vector<8x512xf32>
    %71 = vector.extract_strided_slice %70 {offsets = [0, 0], sizes = [8, 128], strides = [1, 1]} : vector<8x512xf32> to vector<8x128xf32>
    %72 = arith.negf %71 : vector<8x128xf32>
    %73 = math.exp %72 : vector<8x128xf32>
    %cst_21 = arith.constant 1.000000e+00 : f32
    %74 = vector.broadcast %cst_21 : f32 to vector<8x128xf32>
    %75 = arith.addf %74, %73 : vector<8x128xf32>
    %76 = arith.divf %74, %75 : vector<8x128xf32>
    %77 = vector.extract_strided_slice %70 {offsets = [0, 128], sizes = [8, 128], strides = [1, 1]} : vector<8x512xf32> to vector<8x128xf32>
    %78 = arith.negf %77 : vector<8x128xf32>
    %79 = math.exp %78 : vector<8x128xf32>
    %cst_22 = arith.constant 1.000000e+00 : f32
    %80 = vector.broadcast %cst_22 : f32 to vector<8x128xf32>
    %81 = arith.addf %80, %79 : vector<8x128xf32>
    %82 = arith.divf %80, %81 : vector<8x128xf32>
    %83 = vector.extract_strided_slice %70 {offsets = [0, 256], sizes = [8, 128], strides = [1, 1]} : vector<8x512xf32> to vector<8x128xf32>
    %84 = math.tanh %83 : vector<8x128xf32>
    %85 = vector.extract_strided_slice %70 {offsets = [0, 384], sizes = [8, 128], strides = [1, 1]} : vector<8x512xf32> to vector<8x128xf32>
    %86 = arith.negf %85 : vector<8x128xf32>
    %87 = math.exp %86 : vector<8x128xf32>
    %cst_23 = arith.constant 1.000000e+00 : f32
    %88 = vector.broadcast %cst_23 : f32 to vector<8x128xf32>
    %89 = arith.addf %88, %87 : vector<8x128xf32>
    %90 = arith.divf %88, %89 : vector<8x128xf32>
    %91 = arith.mulf %82, %63 : vector<8x128xf32>
    %92 = arith.mulf %76, %84 : vector<8x128xf32>
    %93 = arith.addf %91, %92 : vector<8x128xf32>
    %94 = math.tanh %93 : vector<8x128xf32>
    %95 = arith.mulf %90, %94 : vector<8x128xf32>
    %c3_i32 = arith.constant 3 : i32
    %96 = arith.index_cast %c3_i32 : i32 to index
    %c0_24 = arith.constant 0 : index
    %c0_25 = arith.constant 0 : index
    %97 = vector.load %arg2[%96, %c0_24, %c0_25] : memref<4x8x512xf32, #tpu.memory_space<vmem>>, vector<1x8x512xf32>
    %98 = vector.shape_cast %97 : vector<1x8x512xf32> to vector<8x512xf32>
    %cst_26 = arith.constant dense<0.000000e+00> : vector<8x512xf32>
    %99 = tpu.matmul %95, %3, %cst_26 {dimension_numbers = #tpu.dot_dimension_numbers<[1], [0], [0], [1], [0, 0, 1, 1], [], []>} : vector<8x128xf32>, vector<128x512xf32>, vector<8x512xf32> -> vector<8x512xf32>
    %100 = arith.addf %98, %99 : vector<8x512xf32>
    %101 = vector.extract_strided_slice %100 {offsets = [0, 0], sizes = [8, 128], strides = [1, 1]} : vector<8x512xf32> to vector<8x128xf32>
    %102 = arith.negf %101 : vector<8x128xf32>
    %103 = math.exp %102 : vector<8x128xf32>
    %cst_27 = arith.constant 1.000000e+00 : f32
    %104 = vector.broadcast %cst_27 : f32 to vector<8x128xf32>
    %105 = arith.addf %104, %103 : vector<8x128xf32>
    %106 = arith.divf %104, %105 : vector<8x128xf32>
    %107 = vector.extract_strided_slice %100 {offsets = [0, 128], sizes = [8, 128], strides = [1, 1]} : vector<8x512xf32> to vector<8x128xf32>
    %108 = arith.negf %107 : vector<8x128xf32>
    %109 = math.exp %108 : vector<8x128xf32>
    %cst_28 = arith.constant 1.000000e+00 : f32
    %110 = vector.broadcast %cst_28 : f32 to vector<8x128xf32>
    %111 = arith.addf %110, %109 : vector<8x128xf32>
    %112 = arith.divf %110, %111 : vector<8x128xf32>
    %113 = vector.extract_strided_slice %100 {offsets = [0, 256], sizes = [8, 128], strides = [1, 1]} : vector<8x512xf32> to vector<8x128xf32>
    %114 = math.tanh %113 : vector<8x128xf32>
    %115 = vector.extract_strided_slice %100 {offsets = [0, 384], sizes = [8, 128], strides = [1, 1]} : vector<8x512xf32> to vector<8x128xf32>
    %116 = arith.negf %115 : vector<8x128xf32>
    %117 = math.exp %116 : vector<8x128xf32>
    %cst_29 = arith.constant 1.000000e+00 : f32
    %118 = vector.broadcast %cst_29 : f32 to vector<8x128xf32>
    %119 = arith.addf %118, %117 : vector<8x128xf32>
    %120 = arith.divf %118, %119 : vector<8x128xf32>
    %121 = arith.mulf %112, %93 : vector<8x128xf32>
    %122 = arith.mulf %106, %114 : vector<8x128xf32>
    %123 = arith.addf %121, %122 : vector<8x128xf32>
    %124 = math.tanh %123 : vector<8x128xf32>
    %125 = arith.mulf %120, %124 : vector<8x128xf32>
    %c4_i32 = arith.constant 4 : i32
    %c0_30 = arith.constant 0 : index
    %c0_31 = arith.constant 0 : index
    %126 = vector.load %arg7[%c0_30, %c0_31] : memref<8x128xf32, #tpu.memory_space<vmem>>, vector<8x128xf32>
    tpu.vector_store %arg7[%c0_30, %c0_31], %125 {strides = array<i32>} : memref<8x128xf32, #tpu.memory_space<vmem>>, vector<8x128xf32>,
    %c0_32 = arith.constant 0 : index
    %c0_33 = arith.constant 0 : index
    %127 = vector.load %arg8[%c0_32, %c0_33] : memref<8x128xf32, #tpu.memory_space<vmem>>, vector<8x128xf32>
    tpu.vector_store %arg8[%c0_32, %c0_33], %123 {strides = array<i32>} : memref<8x128xf32, #tpu.memory_space<vmem>>, vector<8x128xf32>,
    %c1_i32_34 = arith.constant 1 : i32
    %128 = arith.cmpi eq, %arg1, %c1_i32_34 : i32
    %129 = arith.extui %128 : i1 to i32
    %c0_i32_35 = arith.constant 0 : i32
    %130 = arith.cmpi ne, %129, %c0_i32_35 : i32
    scf.if %130 {
      %c0_36 = arith.constant 0 : index
      %c0_37 = arith.constant 0 : index
      %131 = vector.load %arg4[%c0_36, %c0_37] : memref<128x128xf32, #tpu.memory_space<vmem>>, vector<128x128xf32>
      %cst_38 = arith.constant dense<0.000000e+00> : vector<8x128xf32>
      %132 = tpu.matmul %125, %131, %cst_38 {dimension_numbers = #tpu.dot_dimension_numbers<[1], [0], [0], [1], [0, 0, 1, 1], [], []>} : vector<8x128xf32>, vector<128x128xf32>, vector<8x128xf32> -> vector<8x128xf32>
      %c0_39 = arith.constant 0 : index
      %c0_40 = arith.constant 0 : index
      %133 = vector.load %arg5[%c0_39, %c0_40] : memref<1x128xf32, #tpu.memory_space<vmem>>, vector<1x128xf32>
      %134 = vector.broadcast %133 : vector<1x128xf32> to vector<8x128xf32>
      %135 = arith.addf %132, %134 : vector<8x128xf32>
      %c0_41 = arith.constant 0 : index
      %c0_42 = arith.constant 0 : index
      %136 = vector.load %arg6[%c0_41, %c0_42] : memref<8x128xf32, #tpu.memory_space<vmem>>, vector<8x128xf32>
      tpu.vector_store %arg6[%c0_41, %c0_42], %135 {strides = array<i32>} : memref<8x128xf32, #tpu.memory_space<vmem>>, vector<8x128xf32>,
    } else {
    }
    return
  }
  func.func @transform_0(%arg0: i32, %arg1: i32) -> (i32, i32, i32) {
    %c0_i32 = arith.constant 0 : i32
    %c0_i32_0 = arith.constant 0 : i32
    return %arg1, %arg0, %c0_i32 : i32, i32, i32
  }
  func.func @transform_1(%arg0: i32, %arg1: i32) -> (i32, i32) {
    %c0_i32 = arith.constant 0 : i32
    %c0_i32_0 = arith.constant 0 : i32
    %c0_i32_1 = arith.constant 0 : i32
    return %c0_i32, %c0_i32_0 : i32, i32
  }
  func.func @transform_2(%arg0: i32, %arg1: i32) -> (i32, i32) {
    %c0_i32 = arith.constant 0 : i32
    %c0_i32_0 = arith.constant 0 : i32
    %c0_i32_1 = arith.constant 0 : i32
    return %c0_i32, %c0_i32_0 : i32, i32
  }
  func.func @transform_3(%arg0: i32, %arg1: i32) -> (i32, i32) {
    %c0_i32 = arith.constant 0 : i32
    %c0_i32_0 = arith.constant 0 : i32
    %c0_i32_1 = arith.constant 0 : i32
    return %c0_i32, %c0_i32_0 : i32, i32
  }
  func.func @transform_4(%arg0: i32, %arg1: i32) -> (i32, i32) {
    %c0_i32 = arith.constant 0 : i32
    %c0_i32_0 = arith.constant 0 : i32
    return %arg0, %c0_i32 : i32, i32
  }
}

</mosaic_0001>

<llo_original>
// kernel: tpu_custom_call.1
$region0: #{tpu_custom_call.1}
  #allocation0 [shape = 'u32[]', space=smem, size = 0x4, offset = 0x4, fixed_abs, tag = 'smem constant byte address 0x4 - core index']
  #allocation1 [shape = 'u32[72,128]{1,0:T(1,128)}', space=vmem, size = 0x9000, scoped, tag = 'internal scratch']
  #allocation2 [shape = 'f32[8,128]{1,0:T(8,128)}', space=vmem, size = 0x1000, scoped, tag = 'scratch operand']
  #allocation3 [shape = 'f32[8,128]{1,0:T(8,128)}', space=vmem, size = 0x1000, scoped, tag = 'scratch operand']
  %s0 = inlined_call_operand.hbm [shape: f32[8,8,512], index: 0, kind: input, shape index: {}]
  %s1 = inlined_call_operand.hbm [shape: f32[128,512], index: 1, kind: input, shape index: {}]
  %s2 = inlined_call_operand.hbm [shape: f32[128,128], index: 2, kind: input, shape index: {}]
  %s3 = inlined_call_operand.vmem [shape: f32[1,128], index: 3, kind: input, shape index: {}]
  %s4 = inlined_call_operand.hbm [shape: f32[8,128], index: 4, kind: output, shape index: {}]
  %s5 = sld [smem:[#allocation0]]
  $region69: #{tpu_custom_call.1} parent=0
    _
  %s7 = ssub.s32 1, %s5
  %s8 = scalar_select 0, %s7, %s5
  $region1: #{tpu_custom_call.1} parent=0
    #allocation4 [shape = 'u8[131072]{0}', space=vmem, size = 0x20000, scoped, tag = 'input window, operand 0']
    #allocation5 [shape = 's32[2]{0}', space=sflag, size = 0x8, scoped, tag = 'scoped memory for tpu_custom_call.1']
    #allocation6 [shape = 's32[2]{0}', space=sflag, size = 0x8, scoped, tag = 'scoped memory for tpu_custom_call.1']
    #allocation7 [shape = 'u8[262144]{0}', space=vmem, size = 0x40000, scoped, tag = 'input window, operand 1, single buffered']
    #allocation8 [shape = 's32[1]{0}', space=sflag, size = 0x4, scoped, tag = 'scoped memory for tpu_custom_call.1']
    #allocation9 [shape = 'u8[65536]{0}', space=vmem, size = 0x10000, scoped, tag = 'input window, operand 2, single buffered']
    #allocation10 [shape = 'u8[4096]{0}', space=vmem, size = 0x1000, scoped, tag = 'output window, operand 0, single buffered']
    %9 = vsyncpa [#allocation5], 0
    %s10 = scalar_lea.sflag [#allocation5], 1
    %11 = vsyncpa %s10, 0
    %12 = vsyncpa [#allocation8], 0
    %13 = vsyncpa [#allocation6], 0
    loop: start=0, step=1, limit=4
    $region2: #{tpu_custom_call.1} parent=1 // loop_pre_header
      _
    $region3: #{tpu_custom_call.1} parent=1 // loop_header
      %s15 = sphi 0, %s19
      %p16 = scmp.ge.s32.totalorder %s15, 4
      %s22 = sphi 0, %s34
      %s23 = sphi 0, %s30
      %s24 = sphi 0, %s22
      %s25 = sphi 0, %s23
      %s26 = sphi 0, %s24
      %s27 = sphi 0, %s25
      %s39 = sphi 0, %s41
      %s42 = sphi 0, %s39
      %s43 = sphi 0, %s42
      %s59 = sphi 0, %s43
      %s63 = sphi 0, %s63
      %s65 = sphi 0, %s63
      %s66 = sphi 0, %s65
      %s80 = sphi 0, %s66
      %s84 = sphi 0, %s84
      %s86 = sphi 0, %s84
      %s87 = sphi 0, %s86
      %s101 = sphi 0, %s87
      %s105 = sphi 0, %s105
      %s107 = sphi 0, %s105
      %s108 = sphi 0, %s107
      %s122 = sphi 0, %s108
      %s128 = sphi 0, %s130
      %s131 = sphi 0, %s128
      %s132 = sphi 0, %s131
      %s148 = sphi 0, %s132
    $region4: #{tpu_custom_call.1} parent=1 // loop_header_branch
      %18 = sbr.rel (%p16) target = $region8
    $region5: #{tpu_custom_call.1} parent=1 // loop_body
      %s20 = ssub.s32 %s15, 1
      %s21 = ssub.s32 %s15, 2
      %s28 = sadd.s32 1, %s23
      %p29 = scmp.ge.s32.totalorder %s28, 2
      %s30 = scalar_select %p29, 0, %s28
      %s31 = sadd.s32 1, %s22
      %s32 = scalar_select %p29, %s31, %s22
      %p33 = scmp.ge.s32.totalorder %s32, 1
      %s34 = scalar_select %p33, 0, %s32
      %s35 = ssub.s32 %s23, %s30
      %s36 = ssub.s32 %s22, %s34
      %s37 = sor.u32 %s35, %s36
      %p38 = scmp.eq.s32.totalorder %s37, 0
      %s40 = sadd.s32 %s39, 1
      %s41 = scalar_select %p38, %s39, %s40
      %p44 = pneg %p38
      %p45 = scmp.eq.s32.totalorder %s15, 1
      %p46 = por %p44, %p45
      %p47 = scmp.ne.s32.totalorder %s39, %s42
      %p48 = scmp.eq.s32.totalorder %s15, 0
      %p49 = por %p47, %p48
      %p50 = scmp.ne.s32.totalorder %s39, %s42
      %p51 = scmp.eq.s32.totalorder %s20, 1
      %p52 = por %p50, %p51
      %p53 = scmp.ne.s32.totalorder %s42, %s43
      %p54 = scmp.eq.s32.totalorder %s20, 0
      %p55 = por %p53, %p54
      %p56 = scmp.ne.s32.totalorder %s42, %s43
      %p57 = scmp.eq.s32.totalorder %s21, 1
      %p58 = por %p56, %p57
      %p60 = scmp.ne.s32.totalorder %s43, %s59
      %p61 = scmp.eq.s32.totalorder %s21, 0
      %p62 = por %p60, %p61
      %s64 = sadd.s32 %s63, 1
      %p67 = scmp.eq.s32.totalorder %s15, 1
      %p68 = scmp.ne.s32.totalorder %s63, %s65
      %p69 = scmp.eq.s32.totalorder %s15, 0
      %p70 = por %p68, %p69
      %p71 = scmp.ne.s32.totalorder %s63, %s65
      %p72 = scmp.eq.s32.totalorder %s20, 1
      %p73 = por %p71, %p72
      %p74 = scmp.ne.s32.totalorder %s65, %s66
      %p75 = scmp.eq.s32.totalorder %s20, 0
      %p76 = por %p74, %p75
      %p77 = scmp.ne.s32.totalorder %s65, %s66
      %p78 = scmp.eq.s32.totalorder %s21, 1
      %p79 = por %p77, %p78
      %p81 = scmp.ne.s32.totalorder %s66, %s80
      %p82 = scmp.eq.s32.totalorder %s21, 0
      %p83 = por %p81, %p82
      %s85 = sadd.s32 %s84, 1
      %p88 = scmp.eq.s32.totalorder %s15, 1
      %p89 = scmp.ne.s32.totalorder %s84, %s86
      %p90 = scmp.eq.s32.totalorder %s15, 0
      %p91 = por %p89, %p90
      %p92 = scmp.ne.s32.totalorder %s84, %s86
      %p93 = scmp.eq.s32.totalorder %s20, 1
      %p94 = por %p92, %p93
      %p95 = scmp.ne.s32.totalorder %s86, %s87
      %p96 = scmp.eq.s32.totalorder %s20, 0
      %p97 = por %p95, %p96
      %p98 = scmp.ne.s32.totalorder %s86, %s87
      %p99 = scmp.eq.s32.totalorder %s21, 1
      %p100 = por %p98, %p99
      %p102 = scmp.ne.s32.totalorder %s87, %s101
      %p103 = scmp.eq.s32.totalorder %s21, 0
      %p104 = por %p102, %p103
      %s106 = sadd.s32 %s105, 1
      %p109 = scmp.eq.s32.totalorder %s15, 1
      %p110 = scmp.ne.s32.totalorder %s105, %s107
      %p111 = scmp.eq.s32.totalorder %s15, 0
      %p112 = por %p110, %p111
      %p113 = scmp.ne.s32.totalorder %s105, %s107
      %p114 = scmp.eq.s32.totalorder %s20, 1
      %p115 = por %p113, %p114
      %p116 = scmp.ne.s32.totalorder %s107, %s108
      %p117 = scmp.eq.s32.totalorder %s20, 0
      %p118 = por %p116, %p117
      %p119 = scmp.ne.s32.totalorder %s107, %s108
      %p120 = scmp.eq.s32.totalorder %s21, 1
      %p121 = por %p119, %p120
      %p123 = scmp.ne.s32.totalorder %s108, %s122
      %p124 = scmp.eq.s32.totalorder %s21, 0
      %p125 = por %p123, %p124
      %s126 = ssub.s32 %s22, %s34
      %p127 = scmp.eq.s32.totalorder %s126, 0
      %s129 = sadd.s32 %s128, 1
      %s130 = scalar_select %p127, %s128, %s129
      %p133 = pneg %p127
      %p134 = scmp.eq.s32.totalorder %s15, 1
      %p135 = por %p133, %p134
      %p136 = scmp.ne.s32.totalorder %s128, %s131
      %p137 = scmp.eq.s32.totalorder %s15, 0
      %p138 = por %p136, %p137
      %p139 = scmp.ne.s32.totalorder %s128, %s131
      %p140 = scmp.eq.s32.totalorder %s20, 1
      %p141 = por %p139, %p140
      %p142 = scmp.ne.s32.totalorder %s131, %s132
      %p143 = scmp.eq.s32.totalorder %s20, 0
      %p144 = por %p142, %p143
      %p145 = scmp.ne.s32.totalorder %s131, %s132
      %p146 = scmp.eq.s32.totalorder %s21, 1
      %p147 = por %p145, %p146
      %p149 = scmp.ne.s32.totalorder %s132, %s148
      %p150 = scmp.eq.s32.totalorder %s21, 0
      %p151 = por %p149, %p150
      %p152 = scmp.le.s32.totalorder 1, %s15
      %p153 = scmp.lt.s32.totalorder %s15, 3
      %p154 = pnand %p152, %p153
      %p155 = pneg %p154
      // Predicated region
      $region9: #{tpu_custom_call.1} parent=5 // pred_check
        _
      $region10: #{tpu_custom_call.1} parent=5 // pred_check_branch
        %157 = sbr.rel (%p154) target = $region12
      $region11: #{tpu_custom_call.1} parent=5 // pred_region
        %s158 = ssub.s32 %s15, 1
        // Predicated region
        $region13: #{tpu_custom_call.1} parent=11 // pred_check
          %p159 = pneg %p76
        $region14: #{tpu_custom_call.1} parent=11 // pred_check_branch
          %161 = sbr.rel (%p159) target = $region16
        $region15: #{tpu_custom_call.1} parent=11 // pred_region
          %163 = vsyncadd [#allocation8], 0
          %s164 = sshll.u32 %s1, 4
          %s165 = int_to_ptr.hbm [resolvable:$true] %s164
          %s166 = sshll.u32 [#allocation7], 4
          %s167 = int_to_ptr.vmem [resolvable:$true] %s166
          %172 = dma.hbm_to_vmem [thread:$0]  %s165, 8192, %s167, [#allocation8], 512, 512, 32
        $region16: #{tpu_custom_call.1} parent=11 // pred_fallthru
          _
        // Predicated region
        $region17: #{tpu_custom_call.1} parent=11 // pred_check
          %p173 = pneg %p97
        $region18: #{tpu_custom_call.1} parent=11 // pred_check_branch
          %175 = sbr.rel (%p173) target = $region20
        $region19: #{tpu_custom_call.1} parent=11 // pred_region
          %177 = vsyncadd [#allocation8], 0
          %s178 = sshll.u32 %s2, 4
          %s179 = int_to_ptr.hbm [resolvable:$true] %s178
          %s180 = sshll.u32 [#allocation9], 4
          %s181 = int_to_ptr.vmem [resolvable:$true] %s180
          %186 = dma.hbm_to_vmem [thread:$0]  %s179, 2048, %s181, [#allocation8], 128, 128, 8
        $region20: #{tpu_custom_call.1} parent=11 // pred_fallthru
          _
        // Predicated region
        $region21: #{tpu_custom_call.1} parent=11 // pred_check
          %p187 = pneg %p118
        $region22: #{tpu_custom_call.1} parent=11 // pred_check_branch
          %189 = sbr.rel (%p187) target = $region24
        $region23: #{tpu_custom_call.1} parent=11 // pred_region
          _
        $region24: #{tpu_custom_call.1} parent=11 // pred_fallthru
          _
      $region12: #{tpu_custom_call.1} parent=5 // pred_fallthru
        _
      %p190 = scmp.lt.s32.totalorder %s15, 2
      // Predicated region
      $region25: #{tpu_custom_call.1} parent=5 // pred_check
        %p191 = pneg %p190
      $region26: #{tpu_custom_call.1} parent=5 // pred_check_branch
        %193 = sbr.rel (%p191) target = $region28
      $region27: #{tpu_custom_call.1} parent=5 // pred_region
        // Predicated region
        $region29: #{tpu_custom_call.1} parent=27 // pred_check
          %p194 = pneg %p49
        $region30: #{tpu_custom_call.1} parent=27 // pred_check_branch
          %196 = sbr.rel (%p194) target = $region32
        $region31: #{tpu_custom_call.1} parent=27 // pred_region
          %s197 = sand.u32 %s39, 1
          %s198 = scalar_lea.sflag [#allocation5], %s197
          %s199 = sand.u32 %s39, 1
          %s200 = smul.addr %s199, 128
          %s201 = scalar_lea.vmem [#allocation4], %s200
          %s202 = smul.u32 4, %s23
          %204 = vsyncadd %s198, 0
          %s205 = smul.addr %s22, 4
          %s206 = smul.addr %s202, 4
          %s207 = sadd.s32 %s205, %s206
          %s208 = smul.addr %s207, 8
          %s209 = scalar_lea.hbm %s0, %s208
          %s210 = sshll.u32 %s209, 4
          %s211 = int_to_ptr.hbm [resolvable:$true] %s210
          %s212 = sshll.u32 %s201, 4
          %s213 = int_to_ptr.vmem [resolvable:$true] %s212
          %218 = dma.hbm_to_vmem [thread:$0]  %s211, 2048, %s213, %s198, 512, 512, 32
        $region32: #{tpu_custom_call.1} parent=27 // pred_fallthru
          _
      $region28: #{tpu_custom_call.1} parent=5 // pred_fallthru
        _
      %p219 = scmp.le.s32.totalorder 1, %s15
      %p220 = scmp.lt.s32.totalorder %s15, 3
      %p221 = pnand %p219, %p220
      %p222 = pneg %p221
      // Predicated region
      $region33: #{tpu_custom_call.1} parent=5 // pred_check
        _
      $region34: #{tpu_custom_call.1} parent=5 // pred_check_branch
        %224 = sbr.rel (%p221) target = $region36
      $region35: #{tpu_custom_call.1} parent=5 // pred_region
        %s225 = ssub.s32 %s15, 1
        %s226 = sand.u32 %s42, 1
        %s227 = scalar_lea.sflag [#allocation5], %s226
        %s228 = sand.u32 %s42, 1
        %s229 = smul.addr %s228, 128
        %s230 = scalar_lea.vmem [#allocation4], %s229
        // Predicated region
        $region37: #{tpu_custom_call.1} parent=35 // pred_check
          %p231 = pneg %p55
        $region38: #{tpu_custom_call.1} parent=35 // pred_check_branch
          %233 = sbr.rel (%p231) target = $region40
        $region39: #{tpu_custom_call.1} parent=35 // pred_region
          %235 = dma.done %s227, 2048
        $region40: #{tpu_custom_call.1} parent=35 // pred_fallthru
          _
        // Predicated region
        $region41: #{tpu_custom_call.1} parent=35 // pred_check
          %p236 = pneg %p76
        $region42: #{tpu_custom_call.1} parent=35 // pred_check_branch
          %238 = sbr.rel (%p236) target = $region44
        $region43: #{tpu_custom_call.1} parent=35 // pred_region
          %240 = dma.done [#allocation8], 8192
        $region44: #{tpu_custom_call.1} parent=35 // pred_fallthru
          _
        // Predicated region
        $region45: #{tpu_custom_call.1} parent=35 // pred_check
          %p241 = pneg %p97
        $region46: #{tpu_custom_call.1} parent=35 // pred_check_branch
          %243 = sbr.rel (%p241) target = $region48
        $region47: #{tpu_custom_call.1} parent=35 // pred_region
          %245 = dma.done [#allocation8], 2048
        $region48: #{tpu_custom_call.1} parent=35 // pred_fallthru
          _
        %s246 = sand.u32 %s42, 1
        %s247 = scalar_lea.sflag [#allocation5], %s246
        %s248 = sand.u32 %s42, 1
        %s249 = smul.addr %s248, 128
        %s250 = scalar_lea.vmem [#allocation4], %s249
        %p251 = pneg %p55
        %p252 = pneg %p52
        %p253 = pneg %p76
        %p254 = pneg %p73
        %p255 = pneg %p97
        %p256 = pneg %p94
        %p257 = pneg %p118
        %p258 = pneg %p115
        %p259 = pneg %p144
        %p260 = pneg %p141
        %s261 = smul.u32 4, %s25
        %p262 = scmp.eq.s32.totalorder %s25, 0
        // Predicated region
        $region49: #{tpu_custom_call.1} parent=35 // pred_check
          %p263 = pneg %p262
        $region50: #{tpu_custom_call.1} parent=35 // pred_check_branch
          %265 = sbr.rel (%p263) target = $region52
        $region51: #{tpu_custom_call.1} parent=35 // pred_region
          %266 = vst [vmem:[#allocation2] sm:$0xff] 0.0
          %267 = vst [vmem:[#allocation3] sm:$0xff] 0.0
        $region52: #{tpu_custom_call.1} parent=35 // pred_fallthru
          _
        %v268 = vld [vmem:[#allocation7] sm:$0xff]
        %v269 = vld [vmem:[#allocation7 + $0x8] sm:$0xff]
        %v270 = vld [vmem:[#allocation7 + $0x10] sm:$0xff]
        %v271 = vld [vmem:[#allocation7 + $0x18] sm:$0xff]
        %v272 = vld [vmem:[#allocation7 + $0x20] sm:$0xff]
        %v273 = vld [vmem:[#allocation7 + $0x28] sm:$0xff]
        %v274 = vld [vmem:[#allocation7 + $0x30] sm:$0xff]
        %v275 = vld [vmem:[#allocation7 + $0x38] sm:$0xff]
        %v276 = vld [vmem:[#allocation7 + $0x40] sm:$0xff]
        %v277 = vld [vmem:[#allocation7 + $0x48] sm:$0xff]
        %v278 = vld [vmem:[#allocation7 + $0x50] sm:$0xff]
        %v279 = vld [vmem:[#allocation7 + $0x58] sm:$0xff]
        %v280 = vld [vmem:[#allocation7 + $0x60] sm:$0xff]
        %v281 = vld [vmem:[#allocation7 + $0x68] sm:$0xff]
        %v282 = vld [vmem:[#allocation7 + $0x70] sm:$0xff]
        %v283 = vld [vmem:[#allocation7 + $0x78] sm:$0xff]
        %v284 = vld [vmem:[#allocation7 + $0x80] sm:$0xff]
        %v285 = vld [vmem:[#allocation7 + $0x88] sm:$0xff]
        %v286 = vld [vmem:[#allocation7 + $0x90] sm:$0xff]
        %v287 = vld [vmem:[#allocation7 + $0x98] sm:$0xff]
        %v288 = vld [vmem:[#allocation7 + $0xa0] sm:$0xff]
        %v289 = vld [vmem:[#allocation7 + $0xa8] sm:$0xff]
        %v290 = vld [vmem:[#allocation7 + $0xb0] sm:$0xff]
        %v291 = vld [vmem:[#allocation7 + $0xb8] sm:$0xff]
        %v292 = vld [vmem:[#allocation7 + $0xc0] sm:$0xff]
        %v293 = vld [vmem:[#allocation7 + $0xc8] sm:$0xff]
        %v294 = vld [vmem:[#allocation7 + $0xd0] sm:$0xff]
        %v295 = vld [vmem:[#allocation7 + $0xd8] sm:$0xff]
        %v296 = vld [vmem:[#allocation7 + $0xe0] sm:$0xff]
        %v297 = vld [vmem:[#allocation7 + $0xe8] sm:$0xff]
        %v298 = vld [vmem:[#allocation7 + $0xf0] sm:$0xff]
        %v299 = vld [vmem:[#allocation7 + $0xf8] sm:$0xff]
        %v300 = vld [vmem:[#allocation7 + $0x100] sm:$0xff]
        %v301 = vld [vmem:[#allocation7 + $0x108] sm:$0xff]
        %v302 = vld [vmem:[#allocation7 + $0x110] sm:$0xff]
        %v303 = vld [vmem:[#allocation7 + $0x118] sm:$0xff]
        %v304 = vld [vmem:[#allocation7 + $0x120] sm:$0xff]
        %v305 = vld [vmem:[#allocation7 + $0x128] sm:$0xff]
        %v306 = vld [vmem:[#allocation7 + $0x130] sm:$0xff]
        %v307 = vld [vmem:[#allocation7 + $0x138] sm:$0xff]
        %v308 = vld [vmem:[#allocation7 + $0x140] sm:$0xff]
        %v309 = vld [vmem:[#allocation7 + $0x148] sm:$0xff]
        %v310 = vld [vmem:[#allocation7 + $0x150] sm:$0xff]
        %v311 = vld [vmem:[#allocation7 + $0x158] sm:$0xff]
        %v312 = vld [vmem:[#allocation7 + $0x160] sm:$0xff]
        %v313 = vld [vmem:[#allocation7 + $0x168] sm:$0xff]
        %v314 = vld [vmem:[#allocation7 + $0x170] sm:$0xff]
        %v315 = vld [vmem:[#allocation7 + $0x178] sm:$0xff]
        %v316 = vld [vmem:[#allocation7 + $0x180] sm:$0xff]
        %v317 = vld [vmem:[#allocation7 + $0x188] sm:$0xff]
        %v318 = vld [vmem:[#allocation7 + $0x190] sm:$0xff]
        %v319 = vld [vmem:[#allocation7 + $0x198] sm:$0xff]
        %v320 = vld [vmem:[#allocation7 + $0x1a0] sm:$0xff]
        %v321 = vld [vmem:[#allocation7 + $0x1a8] sm:$0xff]
        %v322 = vld [vmem:[#allocation7 + $0x1b0] sm:$0xff]
        %v323 = vld [vmem:[#allocation7 + $0x1b8] sm:$0xff]
        %v324 = vld [vmem:[#allocation7 + $0x1c0] sm:$0xff]
        %v325 = vld [vmem:[#allocation7 + $0x1c8] sm:$0xff]
        %v326 = vld [vmem:[#allocation7 + $0x1d0] sm:$0xff]
        %v327 = vld [vmem:[#allocation7 + $0x1d8] sm:$0xff]
        %v328 = vld [vmem:[#allocation7 + $0x1e0] sm:$0xff]
        %v329 = vld [vmem:[#allocation7 + $0x1e8] sm:$0xff]
        %v330 = vld [vmem:[#allocation7 + $0x1f0] sm:$0xff]
        %v331 = vld [vmem:[#allocation7 + $0x1f8] sm:$0xff]
        %v332 = vld [vmem:[#allocation2] sm:$0xff]
        %v333 = vld [vmem:[#allocation3] sm:$0xff]
        %v334 = vld [vmem:[%s230] sm:$0xff]
        %v335 = vld [vmem:[%s230 + $0x8] sm:$0xff]
        %v336 = vld [vmem:[%s230 + $0x10] sm:$0xff]
        %v337 = vld [vmem:[%s230 + $0x18] sm:$0xff]
        %338 = vmatpush.msra.mxu0 %v328
        %339 = vmatpush.msra.mxu0 %v324
        %340 = vmatpush.msra.mxu0 %v320
        %341 = vmatpush.msra.mxu0 %v316
        %342 = vmatpush.msra.mxu0 %v312
        %343 = vmatpush.msra.mxu0 %v308
        %344 = vmatpush.msra.mxu0 %v304
        %345 = vmatpush.msra.mxu0 %v300
        %346 = vmatpush.msra.mxu0 %v296
        %347 = vmatpush.msra.mxu0 %v292
        %348 = vmatpush.msra.mxu0 %v288
        %349 = vmatpush.msra.mxu0 %v284
        %350 = vmatpush.msra.mxu0 %v280
        %351 = vmatpush.msra.mxu0 %v276
        %352 = vmatpush.msra.mxu0 %v272
        %353 = vmatpush.msra.mxu0 %v268
        %354 = vmatmul.f32.gmra.mxu0 %v332
        %v355 = vpop.f32.mrf.mxu0
        %v356 = vadd.f32 0.0, %v355
        %357 = vdwg.mxu0
        %358 = vmatpush.msra.mxu0 %v329
        %359 = vmatpush.msra.mxu0 %v325
        %360 = vmatpush.msra.mxu0 %v321
        %361 = vmatpush.msra.mxu0 %v317
        %362 = vmatpush.msra.mxu0 %v313
        %363 = vmatpush.msra.mxu0 %v309
        %364 = vmatpush.msra.mxu0 %v305
        %365 = vmatpush.msra.mxu0 %v301
        %366 = vmatpush.msra.mxu0 %v297
        %367 = vmatpush.msra.mxu0 %v293
        %368 = vmatpush.msra.mxu0 %v289
        %369 = vmatpush.msra.mxu0 %v285
        %370 = vmatpush.msra.mxu0 %v281
        %371 = vmatpush.msra.mxu0 %v277
        %372 = vmatpush.msra.mxu0 %v273
        %373 = vmatpush.msra.mxu0 %v269
        %374 = vmatmul.f32.gmra.mxu0 %v332
        %v375 = vpop.f32.mrf.mxu0
        %v376 = vadd.f32 0.0, %v375
        %377 = vdwg.mxu0
        %378 = vmatpush.msra.mxu0 %v330
        %379 = vmatpush.msra.mxu0 %v326
        %380 = vmatpush.msra.mxu0 %v322
        %381 = vmatpush.msra.mxu0 %v318
        %382 = vmatpush.msra.mxu0 %v314
        %383 = vmatpush.msra.mxu0 %v310
        %384 = vmatpush.msra.mxu0 %v306
        %385 = vmatpush.msra.mxu0 %v302
        %386 = vmatpush.msra.mxu0 %v298
        %387 = vmatpush.msra.mxu0 %v294
        %388 = vmatpush.msra.mxu0 %v290
        %389 = vmatpush.msra.mxu0 %v286
        %390 = vmatpush.msra.mxu0 %v282
        %391 = vmatpush.msra.mxu0 %v278
        %392 = vmatpush.msra.mxu0 %v274
        %393 = vmatpush.msra.mxu0 %v270
        %394 = vmatmul.f32.gmra.mxu0 %v332
        %v395 = vpop.f32.mrf.mxu0
        %v396 = vadd.f32 0.0, %v395
        %397 = vdwg.mxu0
        %398 = vmatpush.msra.mxu0 %v331
        %399 = vmatpush.msra.mxu0 %v327
        %400 = vmatpush.msra.mxu0 %v323
        %401 = vmatpush.msra.mxu0 %v319
        %402 = vmatpush.msra.mxu0 %v315
        %403 = vmatpush.msra.mxu0 %v311
        %404 = vmatpush.msra.mxu0 %v307
        %405 = vmatpush.msra.mxu0 %v303
        %406 = vmatpush.msra.mxu0 %v299
        %407 = vmatpush.msra.mxu0 %v295
        %408 = vmatpush.msra.mxu0 %v291
        %409 = vmatpush.msra.mxu0 %v287
        %410 = vmatpush.msra.mxu0 %v283
        %411 = vmatpush.msra.mxu0 %v279
        %412 = vmatpush.msra.mxu0 %v275
        %413 = vmatpush.msra.mxu0 %v271
        %414 = vmatmul.f32.gmra.mxu0 %v332
        %v415 = vpop.f32.mrf.mxu0
        %v416 = vadd.f32 0.0, %v415
        %417 = vdwg.mxu0
        %v418 = vadd.f32 %v334, %v356
        %v419 = vadd.f32 %v335, %v376
        %v420 = vadd.f32 %v336, %v396
        %v421 = vadd.f32 %v337, %v416
        %v422 = vxor.u32 %v418, 2147483648
        %v423 = vmul.f32 %v422, 1.442695
        %v424 = vpow.pop %v423
        %v425 = vadd.f32 %v424, 1.0
        %v426 = vrcp.pop %v425
        %v427 = vmul.f32 %v425, %v426
        %v428 = vsub.f32 1.0, %v427
        %v429 = vmul.f32 %v426, %v428
        %v430 = vadd.f32 %v426, %v429
        %vm431 = vweird.f32 %v425
        %vm432 = vweird.f32 %v426
        %vm433 = vmor %vm431, %vm432
        %v434 = vsel %vm433, %v426, %v430
        %v435 = vand.u32 2147483647, %v425
        %vm436 = vcmp.eq.f32.partialorder %v435, 8.507059e+37
        %v437 = vand.u32 %v425, 2147483648
        %v438 = vor.u32 1.1754944e-38, %v437
        %v439 = vsel %vm436, %v438, %v434
        %v440 = vmul.f32 1.0, %v439
        %v441 = vxor.u32 %v419, 2147483648
        %v442 = vmul.f32 %v441, 1.442695
        %v443 = vpow.pop %v442
        %v444 = vadd.f32 %v443, 1.0
        %v445 = vrcp.pop %v444
        %v446 = vmul.f32 %v444, %v445
        %v447 = vsub.f32 1.0, %v446
        %v448 = vmul.f32 %v445, %v447
        %v449 = vadd.f32 %v445, %v448
        %vm450 = vweird.f32 %v444
        %vm451 = vweird.f32 %v445
        %vm452 = vmor %vm450, %vm451
        %v453 = vsel %vm452, %v445, %v449
        %v454 = vand.u32 2147483647, %v444
        %vm455 = vcmp.eq.f32.partialorder %v454, 8.507059e+37
        %v456 = vand.u32 %v444, 2147483648
        %v457 = vor.u32 1.1754944e-38, %v456
        %v458 = vsel %vm455, %v457, %v453
        %v459 = vmul.f32 1.0, %v458
        %v460 = vtanh.pop %v420
        %v461 = vxor.u32 %v421, 2147483648
        %v462 = vmul.f32 %v461, 1.442695
        %v463 = vpow.pop %v462
        %v464 = vadd.f32 %v463, 1.0
        %v465 = vrcp.pop %v464
        %v466 = vmul.f32 %v464, %v465
        %v467 = vsub.f32 1.0, %v466
        %v468 = vmul.f32 %v465, %v467
        %v469 = vadd.f32 %v465, %v468
        %vm470 = vweird.f32 %v464
        %vm471 = vweird.f32 %v465
        %vm472 = vmor %vm470, %vm471
        %v473 = vsel %vm472, %v465, %v469
        %v474 = vand.u32 2147483647, %v464
        %vm475 = vcmp.eq.f32.partialorder %v474, 8.507059e+37
        %v476 = vand.u32 %v464, 2147483648
        %v477 = vor.u32 1.1754944e-38, %v476
        %v478 = vsel %vm475, %v477, %v473
        %v479 = vmul.f32 1.0, %v478
        %v480 = vmul.f32 %v459, %v333
        %v481 = vmul.f32 %v440, %v460
        %v482 = vadd.f32 %v480, %v481
        %v483 = vtanh.pop %v482
        %v484 = vmul.f32 %v479, %v483
        %s485 = scalar_lea.vmem %s230, 32 [#allocation4]
        %v486 = vld [vmem:[%s485] sm:$0xff]
        %v487 = vld [vmem:[%s485 + $0x8] sm:$0xff]
        %v488 = vld [vmem:[%s485 + $0x10] sm:$0xff]
        %v489 = vld [vmem:[%s485 + $0x18] sm:$0xff]
        %490 = vmatpush.msra.mxu0 %v328
        %491 = vmatpush.msra.mxu0 %v324
        %492 = vmatpush.msra.mxu0 %v320
        %493 = vmatpush.msra.mxu0 %v316
        %494 = vmatpush.msra.mxu0 %v312
        %495 = vmatpush.msra.mxu0 %v308
        %496 = vmatpush.msra.mxu0 %v304
        %497 = vmatpush.msra.mxu0 %v300
        %498 = vmatpush.msra.mxu0 %v296
        %499 = vmatpush.msra.mxu0 %v292
        %500 = vmatpush.msra.mxu0 %v288
        %501 = vmatpush.msra.mxu0 %v284
        %502 = vmatpush.msra.mxu0 %v280
        %503 = vmatpush.msra.mxu0 %v276
        %504 = vmatpush.msra.mxu0 %v272
        %505 = vmatpush.msra.mxu0 %v268
        %506 = vmatmul.f32.gmra.mxu0 %v484
        %v507 = vpop.f32.mrf.mxu0
        %v508 = vadd.f32 0.0, %v507
        %509 = vdwg.mxu0
        %510 = vmatpush.msra.mxu0 %v329
        %511 = vmatpush.msra.mxu0 %v325
        %512 = vmatpush.msra.mxu0 %v321
        %513 = vmatpush.msra.mxu0 %v317
        %514 = vmatpush.msra.mxu0 %v313
        %515 = vmatpush.msra.mxu0 %v309
        %516 = vmatpush.msra.mxu0 %v305
        %517 = vmatpush.msra.mxu0 %v301
        %518 = vmatpush.msra.mxu0 %v297
        %519 = vmatpush.msra.mxu0 %v293
        %520 = vmatpush.msra.mxu0 %v289
        %521 = vmatpush.msra.mxu0 %v285
        %522 = vmatpush.msra.mxu0 %v281
        %523 = vmatpush.msra.mxu0 %v277
        %524 = vmatpush.msra.mxu0 %v273
        %525 = vmatpush.msra.mxu0 %v269
        %526 = vmatmul.f32.gmra.mxu0 %v484
        %v527 = vpop.f32.mrf.mxu0
        %v528 = vadd.f32 0.0, %v527
        %529 = vdwg.mxu0
        %530 = vmatpush.msra.mxu0 %v330
        %531 = vmatpush.msra.mxu0 %v326
        %532 = vmatpush.msra.mxu0 %v322
        %533 = vmatpush.msra.mxu0 %v318
        %534 = vmatpush.msra.mxu0 %v314
        %535 = vmatpush.msra.mxu0 %v310
        %536 = vmatpush.msra.mxu0 %v306
        %537 = vmatpush.msra.mxu0 %v302
        %538 = vmatpush.msra.mxu0 %v298
        %539 = vmatpush.msra.mxu0 %v294
        %540 = vmatpush.msra.mxu0 %v290
        %541 = vmatpush.msra.mxu0 %v286
        %542 = vmatpush.msra.mxu0 %v282
        %543 = vmatpush.msra.mxu0 %v278
        %544 = vmatpush.msra.mxu0 %v274
        %545 = vmatpush.msra.mxu0 %v270
        %546 = vmatmul.f32.gmra.mxu0 %v484
        %v547 = vpop.f32.mrf.mxu0
        %v548 = vadd.f32 0.0, %v547
        %549 = vdwg.mxu0
        %550 = vmatpush.msra.mxu0 %v331
        %551 = vmatpush.msra.mxu0 %v327
        %552 = vmatpush.msra.mxu0 %v323
        %553 = vmatpush.msra.mxu0 %v319
        %554 = vmatpush.msra.mxu0 %v315
        %555 = vmatpush.msra.mxu0 %v311
        %556 = vmatpush.msra.mxu0 %v307
        %557 = vmatpush.msra.mxu0 %v303
        %558 = vmatpush.msra.mxu0 %v299
        %559 = vmatpush.msra.mxu0 %v295
        %560 = vmatpush.msra.mxu0 %v291
        %561 = vmatpush.msra.mxu0 %v287
        %562 = vmatpush.msra.mxu0 %v283
        %563 = vmatpush.msra.mxu0 %v279
        %564 = vmatpush.msra.mxu0 %v275
        %565 = vmatpush.msra.mxu0 %v271
        %566 = vmatmul.f32.gmra.mxu0 %v484
        %v567 = vpop.f32.mrf.mxu0
        %v568 = vadd.f32 0.0, %v567
        %569 = vdwg.mxu0
        %v570 = vadd.f32 %v486, %v508
        %v571 = vadd.f32 %v487, %v528
        %v572 = vadd.f32 %v488, %v548
        %v573 = vadd.f32 %v489, %v568
        %v574 = vxor.u32 %v570, 2147483648
        %v575 = vmul.f32 %v574, 1.442695
        %v576 = vpow.pop %v575
        %v577 = vadd.f32 %v576, 1.0
        %v578 = vrcp.pop %v577
        %v579 = vmul.f32 %v577, %v578
        %v580 = vsub.f32 1.0, %v579
        %v581 = vmul.f32 %v578, %v580
        %v582 = vadd.f32 %v578, %v581
        %vm583 = vweird.f32 %v577
        %vm584 = vweird.f32 %v578
        %vm585 = vmor %vm583, %vm584
        %v586 = vsel %vm585, %v578, %v582
        %v587 = vand.u32 2147483647, %v577
        %vm588 = vcmp.eq.f32.partialorder %v587, 8.507059e+37
        %v589 = vand.u32 %v577, 2147483648
        %v590 = vor.u32 1.1754944e-38, %v589
        %v591 = vsel %vm588, %v590, %v586
        %v592 = vmul.f32 1.0, %v591
        %v593 = vxor.u32 %v571, 2147483648
        %v594 = vmul.f32 %v593, 1.442695
        %v595 = vpow.pop %v594
        %v596 = vadd.f32 %v595, 1.0
        %v597 = vrcp.pop %v596
        %v598 = vmul.f32 %v596, %v597
        %v599 = vsub.f32 1.0, %v598
        %v600 = vmul.f32 %v597, %v599
        %v601 = vadd.f32 %v597, %v600
        %vm602 = vweird.f32 %v596
        %vm603 = vweird.f32 %v597
        %vm604 = vmor %vm602, %vm603
        %v605 = vsel %vm604, %v597, %v601
        %v606 = vand.u32 2147483647, %v596
        %vm607 = vcmp.eq.f32.partialorder %v606, 8.507059e+37
        %v608 = vand.u32 %v596, 2147483648
        %v609 = vor.u32 1.1754944e-38, %v608
        %v610 = vsel %vm607, %v609, %v605
        %v611 = vmul.f32 1.0, %v610
        %v612 = vtanh.pop %v572
        %v613 = vxor.u32 %v573, 2147483648
        %v614 = vmul.f32 %v613, 1.442695
        %v615 = vpow.pop %v614
        %v616 = vadd.f32 %v615, 1.0
        %v617 = vrcp.pop %v616
        %v618 = vmul.f32 %v616, %v617
        %v619 = vsub.f32 1.0, %v618
        %v620 = vmul.f32 %v617, %v619
        %v621 = vadd.f32 %v617, %v620
        %vm622 = vweird.f32 %v616
        %vm623 = vweird.f32 %v617
        %vm624 = vmor %vm622, %vm623
        %v625 = vsel %vm624, %v617, %v621
        %v626 = vand.u32 2147483647, %v616
        %vm627 = vcmp.eq.f32.partialorder %v626, 8.507059e+37
        %v628 = vand.u32 %v616, 2147483648
        %v629 = vor.u32 1.1754944e-38, %v628
        %v630 = vsel %vm627, %v629, %v625
        %v631 = vmul.f32 1.0, %v630
        %v632 = vmul.f32 %v611, %v482
        %v633 = vmul.f32 %v592, %v612
        %v634 = vadd.f32 %v632, %v633
        %v635 = vtanh.pop %v634
        %v636 = vmul.f32 %v631, %v635
        %s637 = scalar_lea.vmem %s230, 64 [#allocation4]
        %v638 = vld [vmem:[%s637] sm:$0xff]
        %v639 = vld [vmem:[%s637 + $0x8] sm:$0xff]
        %v640 = vld [vmem:[%s637 + $0x10] sm:$0xff]
        %v641 = vld [vmem:[%s637 + $0x18] sm:$0xff]
        %642 = vmatpush.msra.mxu0 %v328
        %643 = vmatpush.msra.mxu0 %v324
        %644 = vmatpush.msra.mxu0 %v320
        %645 = vmatpush.msra.mxu0 %v316
        %646 = vmatpush.msra.mxu0 %v312
        %647 = vmatpush.msra.mxu0 %v308
        %648 = vmatpush.msra.mxu0 %v304
        %649 = vmatpush.msra.mxu0 %v300
        %650 = vmatpush.msra.mxu0 %v296
        %651 = vmatpush.msra.mxu0 %v292
        %652 = vmatpush.msra.mxu0 %v288
        %653 = vmatpush.msra.mxu0 %v284
        %654 = vmatpush.msra.mxu0 %v280
        %655 = vmatpush.msra.mxu0 %v276
        %656 = vmatpush.msra.mxu0 %v272
        %657 = vmatpush.msra.mxu0 %v268
        %658 = vmatmul.f32.gmra.mxu0 %v636
        %v659 = vpop.f32.mrf.mxu0
        %v660 = vadd.f32 0.0, %v659
        %661 = vdwg.mxu0
        %662 = vmatpush.msra.mxu0 %v329
        %663 = vmatpush.msra.mxu0 %v325
        %664 = vmatpush.msra.mxu0 %v321
        %665 = vmatpush.msra.mxu0 %v317
        %666 = vmatpush.msra.mxu0 %v313
        %667 = vmatpush.msra.mxu0 %v309
        %668 = vmatpush.msra.mxu0 %v305
        %669 = vmatpush.msra.mxu0 %v301
        %670 = vmatpush.msra.mxu0 %v297
        %671 = vmatpush.msra.mxu0 %v293
        %672 = vmatpush.msra.mxu0 %v289
        %673 = vmatpush.msra.mxu0 %v285
        %674 = vmatpush.msra.mxu0 %v281
        %675 = vmatpush.msra.mxu0 %v277
        %676 = vmatpush.msra.mxu0 %v273
        %677 = vmatpush.msra.mxu0 %v269
        %678 = vmatmul.f32.gmra.mxu0 %v636
        %v679 = vpop.f32.mrf.mxu0
        %v680 = vadd.f32 0.0, %v679
        %681 = vdwg.mxu0
        %682 = vmatpush.msra.mxu0 %v330
        %683 = vmatpush.msra.mxu0 %v326
        %684 = vmatpush.msra.mxu0 %v322
        %685 = vmatpush.msra.mxu0 %v318
        %686 = vmatpush.msra.mxu0 %v314
        %687 = vmatpush.msra.mxu0 %v310
        %688 = vmatpush.msra.mxu0 %v306
        %689 = vmatpush.msra.mxu0 %v302
        %690 = vmatpush.msra.mxu0 %v298
        %691 = vmatpush.msra.mxu0 %v294
        %692 = vmatpush.msra.mxu0 %v290
        %693 = vmatpush.msra.mxu0 %v286
        %694 = vmatpush.msra.mxu0 %v282
        %695 = vmatpush.msra.mxu0 %v278
        %696 = vmatpush.msra.mxu0 %v274
        %697 = vmatpush.msra.mxu0 %v270
        %698 = vmatmul.f32.gmra.mxu0 %v636
        %v699 = vpop.f32.mrf.mxu0
        %v700 = vadd.f32 0.0, %v699
        %701 = vdwg.mxu0
        %702 = vmatpush.msra.mxu0 %v331
        %703 = vmatpush.msra.mxu0 %v327
        %704 = vmatpush.msra.mxu0 %v323
        %705 = vmatpush.msra.mxu0 %v319
        %706 = vmatpush.msra.mxu0 %v315
        %707 = vmatpush.msra.mxu0 %v311
        %708 = vmatpush.msra.mxu0 %v307
        %709 = vmatpush.msra.mxu0 %v303
        %710 = vmatpush.msra.mxu0 %v299
        %711 = vmatpush.msra.mxu0 %v295
        %712 = vmatpush.msra.mxu0 %v291
        %713 = vmatpush.msra.mxu0 %v287
        %714 = vmatpush.msra.mxu0 %v283
        %715 = vmatpush.msra.mxu0 %v279
        %716 = vmatpush.msra.mxu0 %v275
        %717 = vmatpush.msra.mxu0 %v271
        %718 = vmatmul.f32.gmra.mxu0 %v636
        %v719 = vpop.f32.mrf.mxu0
        %v720 = vadd.f32 0.0, %v719
        %721 = vdwg.mxu0
        %v722 = vadd.f32 %v638, %v660
        %v723 = vadd.f32 %v639, %v680
        %v724 = vadd.f32 %v640, %v700
        %v725 = vadd.f32 %v641, %v720
        %v726 = vxor.u32 %v722, 2147483648
        %v727 = vmul.f32 %v726, 1.442695
        %v728 = vpow.pop %v727
        %v729 = vadd.f32 %v728, 1.0
        %v730 = vrcp.pop %v729
        %v731 = vmul.f32 %v729, %v730
        %v732 = vsub.f32 1.0, %v731
        %v733 = vmul.f32 %v730, %v732
        %v734 = vadd.f32 %v730, %v733
        %vm735 = vweird.f32 %v729
        %vm736 = vweird.f32 %v730
        %vm737 = vmor %vm735, %vm736
        %v738 = vsel %vm737, %v730, %v734
        %v739 = vand.u32 2147483647, %v729
        %vm740 = vcmp.eq.f32.partialorder %v739, 8.507059e+37
        %v741 = vand.u32 %v729, 2147483648
        %v742 = vor.u32 1.1754944e-38, %v741
        %v743 = vsel %vm740, %v742, %v738
        %v744 = vmul.f32 1.0, %v743
        %v745 = vxor.u32 %v723, 2147483648
        %v746 = vmul.f32 %v745, 1.442695
        %v747 = vpow.pop %v746
        %v748 = vadd.f32 %v747, 1.0
        %v749 = vrcp.pop %v748
        %v750 = vmul.f32 %v748, %v749
        %v751 = vsub.f32 1.0, %v750
        %v752 = vmul.f32 %v749, %v751
        %v753 = vadd.f32 %v749, %v752
        %vm754 = vweird.f32 %v748
        %vm755 = vweird.f32 %v749
        %vm756 = vmor %vm754, %vm755
        %v757 = vsel %vm756, %v749, %v753
        %v758 = vand.u32 2147483647, %v748
        %vm759 = vcmp.eq.f32.partialorder %v758, 8.507059e+37
        %v760 = vand.u32 %v748, 2147483648
        %v761 = vor.u32 1.1754944e-38, %v760
        %v762 = vsel %vm759, %v761, %v757
        %v763 = vmul.f32 1.0, %v762
        %v764 = vtanh.pop %v724
        %v765 = vxor.u32 %v725, 2147483648
        %v766 = vmul.f32 %v765, 1.442695
        %v767 = vpow.pop %v766
        %v768 = vadd.f32 %v767, 1.0
        %v769 = vrcp.pop %v768
        %v770 = vmul.f32 %v768, %v769
        %v771 = vsub.f32 1.0, %v770
        %v772 = vmul.f32 %v769, %v771
        %v773 = vadd.f32 %v769, %v772
        %vm774 = vweird.f32 %v768
        %vm775 = vweird.f32 %v769
        %vm776 = vmor %vm774, %vm775
        %v777 = vsel %vm776, %v769, %v773
        %v778 = vand.u32 2147483647, %v768
        %vm779 = vcmp.eq.f32.partialorder %v778, 8.507059e+37
        %v780 = vand.u32 %v768, 2147483648
        %v781 = vor.u32 1.1754944e-38, %v780
        %v782 = vsel %vm779, %v781, %v777
        %v783 = vmul.f32 1.0, %v782
        %v784 = vmul.f32 %v763, %v634
        %v785 = vmul.f32 %v744, %v764
        %v786 = vadd.f32 %v784, %v785
        %v787 = vtanh.pop %v786
        %v788 = vmul.f32 %v783, %v787
        %s789 = scalar_lea.vmem %s230, 96 [#allocation4]
        %v790 = vld [vmem:[%s789] sm:$0xff]
        %v791 = vld [vmem:[%s789 + $0x8] sm:$0xff]
        %v792 = vld [vmem:[%s789 + $0x10] sm:$0xff]
        %v793 = vld [vmem:[%s789 + $0x18] sm:$0xff]
        %794 = vmatpush.msra.mxu0 %v328
        %795 = vmatpush.msra.mxu0 %v324
        %796 = vmatpush.msra.mxu0 %v320
        %797 = vmatpush.msra.mxu0 %v316
        %798 = vmatpush.msra.mxu0 %v312
        %799 = vmatpush.msra.mxu0 %v308
        %800 = vmatpush.msra.mxu0 %v304
        %801 = vmatpush.msra.mxu0 %v300
        %802 = vmatpush.msra.mxu0 %v296
        %803 = vmatpush.msra.mxu0 %v292
        %804 = vmatpush.msra.mxu0 %v288
        %805 = vmatpush.msra.mxu0 %v284
        %806 = vmatpush.msra.mxu0 %v280
        %807 = vmatpush.msra.mxu0 %v276
        %808 = vmatpush.msra.mxu0 %v272
        %809 = vmatpush.msra.mxu0 %v268
        %810 = vmatmul.f32.gmra.mxu0 %v788
        %v811 = vpop.f32.mrf.mxu0
        %v812 = vadd.f32 0.0, %v811
        %813 = vdwg.mxu0
        %814 = vmatpush.msra.mxu0 %v329
        %815 = vmatpush.msra.mxu0 %v325
        %816 = vmatpush.msra.mxu0 %v321
        %817 = vmatpush.msra.mxu0 %v317
        %818 = vmatpush.msra.mxu0 %v313
        %819 = vmatpush.msra.mxu0 %v309
        %820 = vmatpush.msra.mxu0 %v305
        %821 = vmatpush.msra.mxu0 %v301
        %822 = vmatpush.msra.mxu0 %v297
        %823 = vmatpush.msra.mxu0 %v293
        %824 = vmatpush.msra.mxu0 %v289
        %825 = vmatpush.msra.mxu0 %v285
        %826 = vmatpush.msra.mxu0 %v281
        %827 = vmatpush.msra.mxu0 %v277
        %828 = vmatpush.msra.mxu0 %v273
        %829 = vmatpush.msra.mxu0 %v269
        %830 = vmatmul.f32.gmra.mxu0 %v788
        %v831 = vpop.f32.mrf.mxu0
        %v832 = vadd.f32 0.0, %v831
        %833 = vdwg.mxu0
        %834 = vmatpush.msra.mxu0 %v330
        %835 = vmatpush.msra.mxu0 %v326
        %836 = vmatpush.msra.mxu0 %v322
        %837 = vmatpush.msra.mxu0 %v318
        %838 = vmatpush.msra.mxu0 %v314
        %839 = vmatpush.msra.mxu0 %v310
        %840 = vmatpush.msra.mxu0 %v306
        %841 = vmatpush.msra.mxu0 %v302
        %842 = vmatpush.msra.mxu0 %v298
        %843 = vmatpush.msra.mxu0 %v294
        %844 = vmatpush.msra.mxu0 %v290
        %845 = vmatpush.msra.mxu0 %v286
        %846 = vmatpush.msra.mxu0 %v282
        %847 = vmatpush.msra.mxu0 %v278
        %848 = vmatpush.msra.mxu0 %v274
        %849 = vmatpush.msra.mxu0 %v270
        %850 = vmatmul.f32.gmra.mxu0 %v788
        %v851 = vpop.f32.mrf.mxu0
        %v852 = vadd.f32 0.0, %v851
        %853 = vdwg.mxu0
        %854 = vmatpush.msra.mxu0 %v331
        %855 = vmatpush.msra.mxu0 %v327
        %856 = vmatpush.msra.mxu0 %v323
        %857 = vmatpush.msra.mxu0 %v319
        %858 = vmatpush.msra.mxu0 %v315
        %859 = vmatpush.msra.mxu0 %v311
        %860 = vmatpush.msra.mxu0 %v307
        %861 = vmatpush.msra.mxu0 %v303
        %862 = vmatpush.msra.mxu0 %v299
        %863 = vmatpush.msra.mxu0 %v295
        %864 = vmatpush.msra.mxu0 %v291
        %865 = vmatpush.msra.mxu0 %v287
        %866 = vmatpush.msra.mxu0 %v283
        %867 = vmatpush.msra.mxu0 %v279
        %868 = vmatpush.msra.mxu0 %v275
        %869 = vmatpush.msra.mxu0 %v271
        %870 = vmatmul.f32.gmra.mxu0 %v788
        %v871 = vpop.f32.mrf.mxu0
        %v872 = vadd.f32 0.0, %v871
        %873 = vdwg.mxu0
        %v874 = vadd.f32 %v790, %v812
        %v875 = vadd.f32 %v791, %v832
        %v876 = vadd.f32 %v792, %v852
        %v877 = vadd.f32 %v793, %v872
        %v878 = vxor.u32 %v874, 2147483648
        %v879 = vmul.f32 %v878, 1.442695
        %v880 = vpow.pop %v879
        %v881 = vadd.f32 %v880, 1.0
        %v882 = vrcp.pop %v881
        %v883 = vmul.f32 %v881, %v882
        %v884 = vsub.f32 1.0, %v883
        %v885 = vmul.f32 %v882, %v884
        %v886 = vadd.f32 %v882, %v885
        %vm887 = vweird.f32 %v881
        %vm888 = vweird.f32 %v882
        %vm889 = vmor %vm887, %vm888
        %v890 = vsel %vm889, %v882, %v886
        %v891 = vand.u32 2147483647, %v881
        %vm892 = vcmp.eq.f32.partialorder %v891, 8.507059e+37
        %v893 = vand.u32 %v881, 2147483648
        %v894 = vor.u32 1.1754944e-38, %v893
        %v895 = vsel %vm892, %v894, %v890
        %v896 = vmul.f32 1.0, %v895
        %v897 = vxor.u32 %v875, 2147483648
        %v898 = vmul.f32 %v897, 1.442695
        %v899 = vpow.pop %v898
        %v900 = vadd.f32 %v899, 1.0
        %v901 = vrcp.pop %v900
        %v902 = vmul.f32 %v900, %v901
        %v903 = vsub.f32 1.0, %v902
        %v904 = vmul.f32 %v901, %v903
        %v905 = vadd.f32 %v901, %v904
        %vm906 = vweird.f32 %v900
        %vm907 = vweird.f32 %v901
        %vm908 = vmor %vm906, %vm907
        %v909 = vsel %vm908, %v901, %v905
        %v910 = vand.u32 2147483647, %v900
        %vm911 = vcmp.eq.f32.partialorder %v910, 8.507059e+37
        %v912 = vand.u32 %v900, 2147483648
        %v913 = vor.u32 1.1754944e-38, %v912
        %v914 = vsel %vm911, %v913, %v909
        %v915 = vmul.f32 1.0, %v914
        %v916 = vtanh.pop %v876
        %v917 = vxor.u32 %v877, 2147483648
        %v918 = vmul.f32 %v917, 1.442695
        %v919 = vpow.pop %v918
        %v920 = vadd.f32 %v919, 1.0
        %v921 = vrcp.pop %v920
        %v922 = vmul.f32 %v920, %v921
        %v923 = vsub.f32 1.0, %v922
        %v924 = vmul.f32 %v921, %v923
        %v925 = vadd.f32 %v921, %v924
        %vm926 = vweird.f32 %v920
        %vm927 = vweird.f32 %v921
        %vm928 = vmor %vm926, %vm927
        %v929 = vsel %vm928, %v921, %v925
        %v930 = vand.u32 2147483647, %v920
        %vm931 = vcmp.eq.f32.partialorder %v930, 8.507059e+37
        %v932 = vand.u32 %v920, 2147483648
        %v933 = vor.u32 1.1754944e-38, %v932
        %v934 = vsel %vm931, %v933, %v929
        %v935 = vmul.f32 1.0, %v934
        %v936 = vmul.f32 %v915, %v786
        %v937 = vmul.f32 %v896, %v916
        %v938 = vadd.f32 %v936, %v937
        %v939 = vtanh.pop %v938
        %v940 = vmul.f32 %v935, %v939
        %941 = vst [vmem:[#allocation2] sm:$0xff] %v940
        %942 = vst [vmem:[#allocation3] sm:$0xff] %v938
        %p943 = scmp.eq.s32.totalorder %s25, 1
        // Predicated region
        $region53: #{tpu_custom_call.1} parent=35 // pred_check
          %p944 = pneg %p943
        $region54: #{tpu_custom_call.1} parent=35 // pred_check_branch
          %946 = sbr.rel (%p944) target = $region56
        $region55: #{tpu_custom_call.1} parent=35 // pred_region
          %v947 = vld [vmem:[#allocation9] sm:$0xff]
          %v948 = vld [vmem:[#allocation9 + $0x8] sm:$0xff]
          %v949 = vld [vmem:[#allocation9 + $0x10] sm:$0xff]
          %v950 = vld [vmem:[#allocation9 + $0x18] sm:$0xff]
          %v951 = vld [vmem:[#allocation9 + $0x20] sm:$0xff]
          %v952 = vld [vmem:[#allocation9 + $0x28] sm:$0xff]
          %v953 = vld [vmem:[#allocation9 + $0x30] sm:$0xff]
          %v954 = vld [vmem:[#allocation9 + $0x38] sm:$0xff]
          %v955 = vld [vmem:[#allocation9 + $0x40] sm:$0xff]
          %v956 = vld [vmem:[#allocation9 + $0x48] sm:$0xff]
          %v957 = vld [vmem:[#allocation9 + $0x50] sm:$0xff]
          %v958 = vld [vmem:[#allocation9 + $0x58] sm:$0xff]
          %v959 = vld [vmem:[#allocation9 + $0x60] sm:$0xff]
          %v960 = vld [vmem:[#allocation9 + $0x68] sm:$0xff]
          %v961 = vld [vmem:[#allocation9 + $0x70] sm:$0xff]
          %v962 = vld [vmem:[#allocation9 + $0x78] sm:$0xff]
          %v963 = vld [vmem:[%s3] sm:$0x1]
          %v965 = vperm.slane %v963, 0
          %967 = vmatpush.msra.mxu0 %v962
          %968 = vmatpush.msra.mxu0 %v961
          %969 = vmatpush.msra.mxu0 %v960
          %970 = vmatpush.msra.mxu0 %v959
          %971 = vmatpush.msra.mxu0 %v958
          %972 = vmatpush.msra.mxu0 %v957
          %973 = vmatpush.msra.mxu0 %v956
          %974 = vmatpush.msra.mxu0 %v955
          %975 = vmatpush.msra.mxu0 %v954
          %976 = vmatpush.msra.mxu0 %v953
          %977 = vmatpush.msra.mxu0 %v952
          %978 = vmatpush.msra.mxu0 %v951
          %979 = vmatpush.msra.mxu0 %v950
          %980 = vmatpush.msra.mxu0 %v949
          %981 = vmatpush.msra.mxu0 %v948
          %982 = vmatpush.msra.mxu0 %v947
          %983 = vmatmul.f32.gmra.mxu0 %v940
          %v984 = vpop.f32.mrf.mxu0
          %v985 = vadd.f32 %v965, %v984
          %986 = vdwg.mxu0
          %987 = vst [vmem:[#allocation10] sm:$0xff] %v985
        $region56: #{tpu_custom_call.1} parent=35 // pred_fallthru
          _
        // Predicated region
        $region57: #{tpu_custom_call.1} parent=35 // pred_check
          %p988 = pneg %p141
        $region58: #{tpu_custom_call.1} parent=35 // pred_check_branch
          %990 = sbr.rel (%p988) target = $region60
        $region59: #{tpu_custom_call.1} parent=35 // pred_region
          %992 = vsyncadd [#allocation6], 0
          %s993 = smul.addr %s24, 8
          %s994 = scalar_lea.hbm %s4, %s993
          %s996 = sshll.u32 [#allocation10], 4
          %s997 = int_to_ptr.vmem [resolvable:$true] %s996
          %s998 = sshll.u32 %s994, 4
          %s999 = int_to_ptr.hbm [resolvable:$true] %s998
          %1001 = dma.vmem_to_hbm [thread:$0]  %s997, 128, %s999, [#allocation6]
        $region60: #{tpu_custom_call.1} parent=35 // pred_fallthru
          _
        // Predicated region
        $region61: #{tpu_custom_call.1} parent=35 // pred_check
          %p1002 = pneg %p141
        $region62: #{tpu_custom_call.1} parent=35 // pred_check_branch
          %1004 = sbr.rel (%p1002) target = $region64
        $region63: #{tpu_custom_call.1} parent=35 // pred_region
          %1006 = dma.done [#allocation6], 128
        $region64: #{tpu_custom_call.1} parent=35 // pred_fallthru
          _
      $region36: #{tpu_custom_call.1} parent=5 // pred_fallthru
        _
      %p1007 = scmp.le.s32.totalorder 2, %s15
      // Predicated region
      $region65: #{tpu_custom_call.1} parent=5 // pred_check
        %p1008 = pneg %p1007
      $region66: #{tpu_custom_call.1} parent=5 // pred_check_branch
        %1010 = sbr.rel (%p1008) target = $region68
      $region67: #{tpu_custom_call.1} parent=5 // pred_region
        %s1011 = ssub.s32 %s15, 2
      $region68: #{tpu_custom_call.1} parent=5 // pred_fallthru
        _
    $region6: #{tpu_custom_call.1} parent=1 // loop_footer
      %s19 = sadd.s32 1, %s15
    $region7: #{tpu_custom_call.1} parent=1 // loop_footer_branch
      %14 = sbr.rel target = $region3
    $region8: #{tpu_custom_call.1} parent=1 // loop_exit
      _
    %1012 = vsyncpa [#allocation5], 1
    %s1013 = scalar_lea.sflag [#allocation5], 1
    %1014 = vsyncpa %s1013, 1
    %1015 = vsyncpa [#allocation8], 1
    %1016 = vsyncpa [#allocation6], 1
    %s1017 = scalar_lea.sflag [#allocation6], 1
    %1018 = vsyncpa %s1017, 1

</llo_original>
